<compile_context>
chip_gen: v7x
topology: tpu7x:2x2x1
jax: 0.10.0
libtpu: 0.0.40
codegen_flags: <defaults>
</compile_context>

<pallas_src>
import jax
import jax.numpy as jnp
from jax.experimental import pallas as pl
from jax.experimental.pallas import tpu as pltpu


def _linreg_kernel(x_ref, w_ref, b_ref, o_ref):
    # x_ref: (1, tk)  w_ref: (tk, tn)  b_ref/o_ref: (1, tn)
    # Grid = (N // tn, K // tk); axis 1 (k) is the reduction, innermost.
    # o_ref is resident across k (same block index for all k), so accumulate
    # directly into it; bias is the k==0 initializer.
    k = pl.program_id(1)
    part = jnp.dot(x_ref[...], w_ref[...], preferred_element_type=jnp.float32)

    @pl.when(k == 0)
    def _():
        o_ref[...] = b_ref[...] + part

    @pl.when(k != 0)
    def _():
        o_ref[...] += part


def _pick_tile(total: int, align: int, target: int) -> int:
    """Largest divisor of `total` that is a multiple of `align` and <= `target`.

    Falls back to the full extent, which is always a legal block dim (and is
    what we want for small / ragged shapes: one block, no extra grid steps).
    """
    if total <= target or total % align != 0:
        return total
    t = (target // align) * align
    while t >= align:
        if total % t == 0:
            return t
        t -= align
    return total


def linear_regression_forward(x, w, b, target_shape):
    """x: (H, 1, W) float32; w: (H*W, T0*T1); b: (T0*T1, 1) -> (T0, T1)."""
    H, _, W = x.shape
    K = H * W
    N = target_shape[0] * target_shape[1]
    assert w.shape == (K, N)
    assert b.shape == (N, 1)

    # Glue (reshapes) in plain JAX; matmul + bias add in the Pallas kernel.
    x_flat = x.squeeze(1).reshape(1, K)   # (1, K), row-major like .view
    b_row = b.reshape(1, N)               # intended per-output bias

    # Tile selection.  tk is the lane dim of the x block *and* the sublane dim
    # of the w block, so a split tile must be a multiple of 128 (covers both).
    # tn is the lane dim of w / b / out, so a split tile must be a multiple of
    # 128.  Full-extent blocks are used when the dims don't divide cleanly.
    tk = _pick_tile(K, 128, 512)
    tn = _pick_tile(N, 128, 2048)
    grid = (N // tn, K // tk)

    out = pl.pallas_call(
        _linreg_kernel,
        out_shape=jax.ShapeDtypeStruct((1, N), jnp.float32),
        grid_spec=pltpu.PrefetchScalarGridSpec(
            num_scalar_prefetch=0,
            grid=grid,
            in_specs=[
                pl.BlockSpec((1, tk), lambda j, k: (0, k)),     # x (tiny)
                pl.BlockSpec((tk, tn), lambda j, k: (k, j)),    # w (streamed)
                pl.BlockSpec((1, tn), lambda j, k: (0, j)),     # b (resident per j)
            ],
            out_specs=pl.BlockSpec((1, tn), lambda j, k: (0, j)),
        ),
        compiler_params=pltpu.CompilerParams(
            # N tiles independent -> parallel (v7x 2 TCs); K is the reduction.
            dimension_semantics=("parallel", "arbitrary")),
        cost_estimate=pl.CostEstimate(
            flops=2 * K * N,
            transcendentals=0,
            bytes_accessed=4 * (K + K * N + 2 * N)),
    )(x_flat, w, b_row)

    return out.reshape(target_shape[0], target_shape[1])


def _reference(x, w, b, target_shape):
    K = x.shape[0] * x.shape[2]
    N = target_shape[0] * target_shape[1]
    return (x.squeeze(1).reshape(1, K) @ w + b.reshape(1, N)).reshape(
        target_shape[0], target_shape[1])


if __name__ == "__main__":
    key = jax.random.PRNGKey(0)

    # --- Case 1: toy shapes from the module defaults -----------------------
    #   input_shape = [C, H, W] = [4, 16, 16] -> K = 256
    #   target_shape = [T0, T1] = [8, 8]      -> N = 64
    # Collapses to a single block / (1, 1) grid (overhead-bound regime).
    input_shape = [4, 16, 16]
    target_shape = [8, 8]
    H, W = input_shape[1], input_shape[2]
    K = H * W
    N = target_shape[0] * target_shape[1]

    kx, kw, kb, k2 = jax.random.split(key, 4)
    w = jax.random.normal(kw, (K, N), dtype=jnp.float32)
    b = jax.random.normal(kb, (N, 1), dtype=jnp.float32)
    x = jax.random.normal(kx, (H, 1, W), dtype=jnp.float32)

    pred = linear_regression_forward(x, w, b, target_shape)
    pred = jax.block_until_ready(pred)
    ref = _reference(x, w, b, target_shape)
    assert pred.shape == (target_shape[0], target_shape[1])
    assert jnp.allclose(pred, ref, atol=1e-4, rtol=1e-4)

    # --- Case 2: larger shapes to exercise the tiled / accumulator path ----
    #   H = W = 32 -> K = 1024 (tk = 512); T = [32, 64] -> N = 2048 (tn = 2048)
    #   grid = (1, 2): K accumulation directly in the resident output tile.
    target_shape2 = [32, 64]
    H2 = W2 = 32
    K2 = H2 * W2
    N2 = target_shape2[0] * target_shape2[1]

    kx2, kw2, kb2, k3 = jax.random.split(k2, 4)
    w2 = jax.random.normal(kw2, (K2, N2), dtype=jnp.float32)
    b2 = jax.random.normal(kb2, (N2, 1), dtype=jnp.float32)
    x2 = jax.random.normal(kx2, (H2, 1, W2), dtype=jnp.float32)

    pred2 = linear_regression_forward(x2, w2, b2, target_shape2)
    pred2 = jax.block_until_ready(pred2)
    ref2 = _reference(x2, w2, b2, target_shape2)
    assert pred2.shape == (target_shape2[0], target_shape2[1])
    assert jnp.allclose(pred2, ref2, atol=1e-3, rtol=1e-4)

    # --- Case 3: ragged shapes (non multiples of 128) -> full-extent blocks --
    #   H = 20, W = 20 -> K = 400; T = [10, 13] -> N = 130; grid = (1, 1)
    target_shape3 = [10, 13]
    H3 = W3 = 20
    K3 = H3 * W3
    N3 = target_shape3[0] * target_shape3[1]

    kx3, kw3, kb3 = jax.random.split(k3, 3)
    w3 = jax.random.normal(kw3, (K3, N3), dtype=jnp.float32)
    b3 = jax.random.normal(kb3, (N3, 1), dtype=jnp.float32)
    x3 = jax.random.normal(kx3, (H3, 1, W3), dtype=jnp.float32)

    pred3 = linear_regression_forward(x3, w3, b3, target_shape3)
    pred3 = jax.block_until_ready(pred3)
    ref3 = _reference(x3, w3, b3, target_shape3)
    assert pred3.shape == (target_shape3[0], target_shape3[1])
    assert jnp.allclose(pred3, ref3, atol=1e-3, rtol=1e-4)

    print("KERNEL_OK")
</pallas_src>

<mosaic_0001>
module attributes {stable_mosaic.version = 11 : i64} {
  func.func @_linreg_kernel(%arg0: i32, %arg1: i32, %arg2: memref<1x256xf32, #tpu.memory_space<vmem>>, %arg3: memref<256x64xf32, #tpu.memory_space<vmem>>, %arg4: memref<1x64xf32, #tpu.memory_space<vmem>>, %arg5: memref<1x64xf32, #tpu.memory_space<vmem>>) attributes {dimension_semantics = [#tpu.dimension_semantics<parallel>, #tpu.dimension_semantics<arbitrary>], iteration_bounds = array<i64: 1, 1>, scalar_prefetch = 0 : i64, scratch_operands = 0 : i64, tpu.core_type = #tpu.core_type<tc>, window_params = [{transform_indices = @transform_0, window_bounds = array<i64: 1, 256>}, {transform_indices = @transform_1, window_bounds = array<i64: 256, 64>}, {transform_indices = @transform_2, window_bounds = array<i64: 1, 64>}, {transform_indices = @transform_3, window_bounds = array<i64: 1, 64>}]} {
    %c0 = arith.constant 0 : index
    %c0_0 = arith.constant 0 : index
    %0 = vector.load %arg2[%c0, %c0_0] : memref<1x256xf32, #tpu.memory_space<vmem>>, vector<1x256xf32>
    %c0_1 = arith.constant 0 : index
    %c0_2 = arith.constant 0 : index
    %1 = vector.load %arg3[%c0_1, %c0_2] : memref<256x64xf32, #tpu.memory_space<vmem>>, vector<256x64xf32>
    %cst = arith.constant dense<0.000000e+00> : vector<1x64xf32>
    %2 = tpu.matmul %0, %1, %cst {dimension_numbers = #tpu.dot_dimension_numbers<[1], [0], [0], [1], [0, 0, 1, 1], [], []>} : vector<1x256xf32>, vector<256x64xf32>, vector<1x64xf32> -> vector<1x64xf32>
    %c0_i32 = arith.constant 0 : i32
    %3 = arith.cmpi eq, %arg1, %c0_i32 : i32
    %4 = arith.extui %3 : i1 to i32
    %c0_i32_3 = arith.constant 0 : i32
    %5 = arith.cmpi ne, %4, %c0_i32_3 : i32
    scf.if %5 {
      %c0_6 = arith.constant 0 : index
      %c0_7 = arith.constant 0 : index
      %9 = vector.load %arg4[%c0_6, %c0_7] : memref<1x64xf32, #tpu.memory_space<vmem>>, vector<1x64xf32>
      %10 = arith.addf %9, %2 : vector<1x64xf32>
      %c0_8 = arith.constant 0 : index
      %c0_9 = arith.constant 0 : index
      %11 = vector.load %arg5[%c0_8, %c0_9] : memref<1x64xf32, #tpu.memory_space<vmem>>, vector<1x64xf32>
      tpu.vector_store %arg5[%c0_8, %c0_9], %10 {strides = array<i32>} : memref<1x64xf32, #tpu.memory_space<vmem>>, vector<1x64xf32>,
    } else {
    }
    %c0_i32_4 = arith.constant 0 : i32
    %6 = arith.cmpi ne, %arg1, %c0_i32_4 : i32
    %7 = arith.extui %6 : i1 to i32
    %c0_i32_5 = arith.constant 0 : i32
    %8 = arith.cmpi ne, %7, %c0_i32_5 : i32
    scf.if %8 {
      %c0_6 = arith.constant 0 : index
      %c0_7 = arith.constant 0 : index
      %9 = vector.load %arg5[%c0_6, %c0_7] : memref<1x64xf32, #tpu.memory_space<vmem>>, vector<1x64xf32>
      %10 = arith.addf %9, %2 : vector<1x64xf32>
      %c0_8 = arith.constant 0 : index
      %c0_9 = arith.constant 0 : index
      %11 = vector.load %arg5[%c0_8, %c0_9] : memref<1x64xf32, #tpu.memory_space<vmem>>, vector<1x64xf32>
      tpu.vector_store %arg5[%c0_8, %c0_9], %10 {strides = array<i32>} : memref<1x64xf32, #tpu.memory_space<vmem>>, vector<1x64xf32>,
    } else {
    }
    return
  }
  func.func @transform_0(%arg0: i32, %arg1: i32) -> (i32, i32) {
    %c0_i32 = arith.constant 0 : i32
    %c0_i32_0 = arith.constant 0 : i32
    return %c0_i32, %arg1 : i32, i32
  }
  func.func @transform_1(%arg0: i32, %arg1: i32) -> (i32, i32) {
    %c0_i32 = arith.constant 0 : i32
    return %arg1, %arg0 : i32, i32
  }
  func.func @transform_2(%arg0: i32, %arg1: i32) -> (i32, i32) {
    %c0_i32 = arith.constant 0 : i32
    %c0_i32_0 = arith.constant 0 : i32
    return %c0_i32, %arg0 : i32, i32
  }
  func.func @transform_3(%arg0: i32, %arg1: i32) -> (i32, i32) {
    %c0_i32 = arith.constant 0 : i32
    %c0_i32_0 = arith.constant 0 : i32
    return %c0_i32, %arg0 : i32, i32
  }
}

</mosaic_0001>

<llo_original>
// kernel: tpu_custom_call.1
$region0: #{tpu_custom_call.1}
  #allocation0 [shape = 'u32[]', space=smem, size = 0x4, offset = 0x4, fixed_abs, tag = 'smem constant byte address 0x4 - core index']
  #allocation1 [shape = 'u32[144,128]{1,0:T(1,128)}', space=vmem, size = 0x12000, scoped, tag = 'internal scratch']
  %s0 = inlined_call_operand.vmem [shape: f32[1,256], index: 0, kind: input, shape index: {}]
  %s1 = inlined_call_operand.vmem [shape: f32[256,64], index: 1, kind: input, shape index: {}]
  %s2 = inlined_call_operand.vmem [shape: f32[1,64], index: 2, kind: input, shape index: {}]
  %s3 = inlined_call_operand.hbm [shape: f32[1,64], index: 3, kind: output, shape index: {}]
  %s4 = sld [smem:[#allocation0]]
  $region30: #{tpu_custom_call.1} parent=0
    _
  %s6 = ssub.s32 1, %s4
  %s7 = scalar_select 0, %s6, %s4
  $region1: #{tpu_custom_call.1} parent=0
    #allocation2 [shape = 'u8[512]{0}', space=vmem, size = 0x400, scoped, tag = 'output window, operand 0, single buffered']
    #allocation3 [shape = 's32[1]{0}', space=sflag, size = 0x4, scoped, tag = 'scoped memory for tpu_custom_call.1']
    %8 = vsyncpa [#allocation3], 0
    // Predicated region
    $region2: #{tpu_custom_call.1} parent=1 // pred_check
      _
    $region3: #{tpu_custom_call.1} parent=1 // pred_check_branch
      %10 = sbr.rel (0) target = $region5
    $region4: #{tpu_custom_call.1} parent=1 // pred_region
      _
    $region5: #{tpu_custom_call.1} parent=1 // pred_fallthru
      _
    // Predicated region
    $region6: #{tpu_custom_call.1} parent=1 // pred_check
      _
    $region7: #{tpu_custom_call.1} parent=1 // pred_check_branch
      %12 = sbr.rel (0) target = $region9
    $region8: #{tpu_custom_call.1} parent=1 // pred_region
      _
    $region9: #{tpu_custom_call.1} parent=1 // pred_fallthru
      _
    // Predicated region
    $region10: #{tpu_custom_call.1} parent=1 // pred_check
      _
    $region11: #{tpu_custom_call.1} parent=1 // pred_check_branch
      %14 = sbr.rel (0) target = $region13
    $region12: #{tpu_custom_call.1} parent=1 // pred_region
      _
    $region13: #{tpu_custom_call.1} parent=1 // pred_fallthru
      _
    %v15 = vld [vmem:[%s0] sm:$0x3]
    %v16 = vld [vmem:[%s1] sm:$0xff]
    %v17 = vld [vmem:[%s1 + $0x8] sm:$0xff]
    %v18 = vld [vmem:[%s1 + $0x10] sm:$0xff]
    %v19 = vld [vmem:[%s1 + $0x18] sm:$0xff]
    %v20 = vld [vmem:[%s1 + $0x20] sm:$0xff]
    %v21 = vld [vmem:[%s1 + $0x28] sm:$0xff]
    %v22 = vld [vmem:[%s1 + $0x30] sm:$0xff]
    %v23 = vld [vmem:[%s1 + $0x38] sm:$0xff]
    %v24 = vld [vmem:[%s1 + $0x40] sm:$0xff]
    %v25 = vld [vmem:[%s1 + $0x48] sm:$0xff]
    %v26 = vld [vmem:[%s1 + $0x50] sm:$0xff]
    %v27 = vld [vmem:[%s1 + $0x58] sm:$0xff]
    %v28 = vld [vmem:[%s1 + $0x60] sm:$0xff]
    %v29 = vld [vmem:[%s1 + $0x68] sm:$0xff]
    %v30 = vld [vmem:[%s1 + $0x70] sm:$0xff]
    %v31 = vld [vmem:[%s1 + $0x78] sm:$0xff]
    %v32 = vld [vmem:[%s1 + $0x80] sm:$0xff]
    %v33 = vld [vmem:[%s1 + $0x88] sm:$0xff]
    %v34 = vld [vmem:[%s1 + $0x90] sm:$0xff]
    %v35 = vld [vmem:[%s1 + $0x98] sm:$0xff]
    %v36 = vld [vmem:[%s1 + $0xa0] sm:$0xff]
    %v37 = vld [vmem:[%s1 + $0xa8] sm:$0xff]
    %v38 = vld [vmem:[%s1 + $0xb0] sm:$0xff]
    %v39 = vld [vmem:[%s1 + $0xb8] sm:$0xff]
    %v40 = vld [vmem:[%s1 + $0xc0] sm:$0xff]
    %v41 = vld [vmem:[%s1 + $0xc8] sm:$0xff]
    %v42 = vld [vmem:[%s1 + $0xd0] sm:$0xff]
    %v43 = vld [vmem:[%s1 + $0xd8] sm:$0xff]
    %v44 = vld [vmem:[%s1 + $0xe0] sm:$0xff]
    %v45 = vld [vmem:[%s1 + $0xe8] sm:$0xff]
    %v46 = vld [vmem:[%s1 + $0xf0] sm:$0xff]
    %v47 = vld [vmem:[%s1 + $0xf8] sm:$0xff]
    %v49 = vlaneseq
    %v50 = vshrl.u32 %v49, 7
    %v51 = vsub.s32 0, %v50
    %v52 = vrot.slane %v15, %v51
    %v53 = vlaneseq
    %v54 = vshrl.u32 %v53, 7
    %v55 = vsub.s32 1, %v54
    %v56 = vrot.slane %v15, %v55
    %59 = vmatprep.subr.mxu0 0.0
    %60 = vmatpush1.msra.mxu0 %v16
    %61 = vmatprep.subr.mxu0 0.0
    %62 = vmatpush1.msra.mxu0 %v17
    %63 = vmatprep.subr.mxu0 0.0
    %64 = vmatpush1.msra.mxu0 %v18
    %65 = vmatprep.subr.mxu0 0.0
    %66 = vmatpush1.msra.mxu0 %v19
    %67 = vmatprep.subr.mxu0 0.0
    %68 = vmatpush1.msra.mxu0 %v20
    %69 = vmatprep.subr.mxu0 0.0
    %70 = vmatpush1.msra.mxu0 %v21
    %71 = vmatprep.subr.mxu0 0.0
    %72 = vmatpush1.msra.mxu0 %v22
    %73 = vmatprep.subr.mxu0 0.0
    %74 = vmatpush1.msra.mxu0 %v23
    %75 = vmatprep.subr.mxu0 0.0
    %76 = vmatpush1.msra.mxu0 %v24
    %77 = vmatprep.subr.mxu0 0.0
    %78 = vmatpush1.msra.mxu0 %v25
    %79 = vmatprep.subr.mxu0 0.0
    %80 = vmatpush1.msra.mxu0 %v26
    %81 = vmatprep.subr.mxu0 0.0
    %82 = vmatpush1.msra.mxu0 %v27
    %83 = vmatprep.subr.mxu0 0.0
    %84 = vmatpush1.msra.mxu0 %v28
    %85 = vmatprep.subr.mxu0 0.0
    %86 = vmatpush1.msra.mxu0 %v29
    %87 = vmatprep.subr.mxu0 0.0
    %88 = vmatpush1.msra.mxu0 %v30
    %89 = vmatprep.subr.mxu0 0.0
    %90 = vmatpush1.msra.mxu0 %v31
    %91 = vmatprep.subr.mxu0 0.0
    %92 = vmatpush1.msra.mxu0 %v32
    %93 = vmatprep.subr.mxu0 0.0
    %94 = vmatpush1.msra.mxu0 %v33
    %95 = vmatprep.subr.mxu0 0.0
    %96 = vmatpush1.msra.mxu0 %v34
    %97 = vmatprep.subr.mxu0 0.0
    %98 = vmatpush1.msra.mxu0 %v35
    %99 = vmatprep.subr.mxu0 0.0
    %100 = vmatpush1.msra.mxu0 %v36
    %101 = vmatprep.subr.mxu0 0.0
    %102 = vmatpush1.msra.mxu0 %v37
    %103 = vmatprep.subr.mxu0 0.0
    %104 = vmatpush1.msra.mxu0 %v38
    %105 = vmatprep.subr.mxu0 0.0
    %106 = vmatpush1.msra.mxu0 %v39
    %107 = vmatprep.subr.mxu0 0.0
    %108 = vmatpush1.msra.mxu0 %v40
    %109 = vmatprep.subr.mxu0 0.0
    %110 = vmatpush1.msra.mxu0 %v41
    %111 = vmatprep.subr.mxu0 0.0
    %112 = vmatpush1.msra.mxu0 %v42
    %113 = vmatprep.subr.mxu0 0.0
    %114 = vmatpush1.msra.mxu0 %v43
    %115 = vmatprep.subr.mxu0 0.0
    %116 = vmatpush1.msra.mxu0 %v44
    %117 = vmatprep.subr.mxu0 0.0
    %118 = vmatpush1.msra.mxu0 %v45
    %119 = vmatprep.subr.mxu0 0.0
    %120 = vmatpush1.msra.mxu0 %v46
    %121 = vmatprep.subr.mxu0 0.0
    %122 = vmatpush1.msra.mxu0 %v47
    %123 = vmatprep.mubr.f32.mxu0 %v56
    %124 = vmatmul.mubr.f32.gmra.mrb[0].mxu0 %v52
    %v125 = vpop.f32.mrb[0].mxu0
    %v126 = vadd.f32 0.0, %v125
    %v127 = vpop.f32.mrb[0].mxu0
    %128 = vdwg.mxu0
    %p129 = scmp.eq.s32.totalorder 0, 0
    // Predicated region
    $region14: #{tpu_custom_call.1} parent=1 // pred_check
      %p130 = pneg %p129
    $region15: #{tpu_custom_call.1} parent=1 // pred_check_branch
      %132 = sbr.rel (%p130) target = $region17
    $region16: #{tpu_custom_call.1} parent=1 // pred_region
      %v133 = vld [vmem:[%s2] sm:$0x1]
      %v134 = vadd.f32 %v133, %v126
      %vm135 = vcmask 516096
      %136 = vst.msk [vmem:[#allocation2] sm:$0x1] %vm135, %v134
    $region17: #{tpu_custom_call.1} parent=1 // pred_fallthru
      _
    %p137 = scmp.ne.s32.totalorder 0, 0
    // Predicated region
    $region18: #{tpu_custom_call.1} parent=1 // pred_check
      %p138 = pneg %p137
    $region19: #{tpu_custom_call.1} parent=1 // pred_check_branch
      %140 = sbr.rel (%p138) target = $region21
    $region20: #{tpu_custom_call.1} parent=1 // pred_region
      %v141 = vld [vmem:[#allocation2] sm:$0x1]
      %v142 = vadd.f32 %v141, %v126
      %vm143 = vcmask 516096
      %144 = vst.msk [vmem:[#allocation2] sm:$0x1] %vm143, %v142
    $region21: #{tpu_custom_call.1} parent=1 // pred_fallthru
      _
    // Predicated region
    $region22: #{tpu_custom_call.1} parent=1 // pred_check
      _
    $region23: #{tpu_custom_call.1} parent=1 // pred_check_branch
      %146 = sbr.rel (0) target = $region25
    $region24: #{tpu_custom_call.1} parent=1 // pred_region
      %s148 = ssub.s32 16, 16
      %149 = vsyncadd [#allocation3], %s148
      %s151 = sshll.u32 [#allocation2], 4
      %s152 = int_to_ptr.vmem [resolvable:$true] %s151
      %154 = dma.vmem_to_hbm [thread:$0]  %s152, 16, %s3, [#allocation3]
    $region25: #{tpu_custom_call.1} parent=1 // pred_fallthru
      _
    // Predicated region
    $region26: #{tpu_custom_call.1} parent=1 // pred_check
      _
    $region27: #{tpu_custom_call.1} parent=1 // pred_check_branch
      %156 = sbr.rel (0) target = $region29
    $region28: #{tpu_custom_call.1} parent=1 // pred_region
      %157 = dma.done [#allocation3], 16
    $region29: #{tpu_custom_call.1} parent=1 // pred_fallthru
      _
    %158 = vsyncpa [#allocation3], 1

</llo_original>
